<compile_context>
chip_gen: v7x
topology: tpu7x:2x2x1
jax: 0.10.0
libtpu: 0.0.40
codegen_flags: <defaults>
</compile_context>

<pallas_src>
import jax
import jax.numpy as jnp
from jax import lax
from jax.experimental import pallas as pl
from jax.experimental.pallas import tpu as pltpu


_CHUNK = 128            # rows per inner chunk == one lane-dense output row
_TILE_QUANTUM = 1024    # keeps the output block's sublane dim a multiple of 8
_MAX_TILE_N = 16384     # ~16 MiB double-buffered x tile -> fits every generation


def mlp_kernel(x_ref, w1_ref, b1_ref, w2_ref, b2_ref, w3_ref, b3_ref, o_ref):
    """One batch tile (TILE_N = n_chunks * 128 rows).

    x_ref  : (TILE_N, P)          f32 (cast to the MXU dtype in-kernel)
    w1_ref : (P, H)               compute dtype
    b1_ref : (1, H)               f32
    w2_ref : (H, H)               compute dtype
    b2_ref : (1, H)               f32
    w3_ref : (H, 1)               f32
    b3_ref : (1, 1)               f32
    o_ref  : (TILE_N//128, 128)   f32 - one lane-dense row per 128-row chunk
    """
    cdt = w1_ref.dtype
    # Loop-invariant: load the resident weights/biases once per tile.
    w1 = w1_ref[...]
    w2 = w2_ref[...]
    w3 = w3_ref[...]
    b1 = b1_ref[...]
    b2 = b2_ref[...]
    b3 = b3_ref[...]

    n_chunks = o_ref.shape[0]

    def chunk_body(c, carry):
        off = pl.multiple_of(c * _CHUNK, _CHUNK)
        # In-kernel cast (VPU slack) keeps the HBM stream of x at one f32 pass.
        x_c = x_ref[pl.ds(off, _CHUNK), :].astype(cdt)                # (128, P)
        h1 = jnp.dot(x_c, w1, preferred_element_type=jnp.float32)
        h1 = jnp.maximum(h1 + b1, 0.0)                                # (128, H) f32
        h2 = jnp.dot(h1.astype(cdt), w2, preferred_element_type=jnp.float32)
        h2 = jnp.maximum(h2 + b2, 0.0)                                # (128, H) f32
        # Layer 3 (H -> 1) on the MXU (it has slack at these shapes), then
        # repack the (128, 1) column into a lane-dense (1, 128) row (XLU).
        col = jnp.dot(h2, w3, preferred_element_type=jnp.float32) + b3  # (128, 1)
        o_ref[pl.ds(c, 1), :] = jnp.transpose(col)
        return carry

    lax.fori_loop(0, n_chunks, chunk_body, 0)


def _round_up(x, m):
    return ((x + m - 1) // m) * m


def _choose_tile_n(n):
    """Batch-tile size: big tiles to amortize grid-step overhead, but always
    >=2 grid steps for n > _TILE_QUANTUM so v7x can use both TensorCores."""
    if n <= _TILE_QUANTUM:
        return _TILE_QUANTUM
    half = _round_up(pl.cdiv(n, 2), _TILE_QUANTUM)
    return min(half, _MAX_TILE_N)


def mse_model_forward(x, params, *, compute_dtype=jnp.float32):
    """Run the fused MLP kernel.  x: (N, p) float32.  Returns squeezed (N,).

    compute_dtype selects the MXU streaming dtype for x/W1/W2 (accumulation is
    always f32).  bf16 is recommended for large N (halves MXU passes); x stays
    f32 in HBM and is cast inside the kernel, so HBM traffic is unchanged.
    """
    w1, b1, w2, b2, w3, b3 = params
    N, P = x.shape
    H = w1.shape[1]

    tn = _choose_tile_n(N)
    assert tn % _CHUNK == 0
    grid = (pl.cdiv(N, tn),)
    out_rows = grid[0] * tn // _CHUNK     # padded output rows of width 128

    # Tiny grid-resident weights: cast once outside the per-call hot path.
    w1_in = w1.astype(compute_dtype)
    w2_in = w2.astype(compute_dtype)

    in_specs = [
        pl.BlockSpec((tn, P), lambda i: (i, 0)),   # x: streamed batch tile
        pl.BlockSpec((P, H), lambda i: (0, 0)),    # W1: VMEM-resident
        pl.BlockSpec((1, H), lambda i: (0, 0)),    # b1
        pl.BlockSpec((H, H), lambda i: (0, 0)),    # W2
        pl.BlockSpec((1, H), lambda i: (0, 0)),    # b2
        pl.BlockSpec((H, 1), lambda i: (0, 0)),    # W3
        pl.BlockSpec((1, 1), lambda i: (0, 0)),    # b3
    ]
    out_specs = pl.BlockSpec((tn // _CHUNK, _CHUNK), lambda i: (i, 0))

    # Advisory only: at K=16 / K=64 the MXU cannot approach peak; the kernel is
    # slot-bound (stores / VPU / MXU issue cadence), not bandwidth-bound.
    flops = 2 * N * (P * H + H * H + H)
    bytes_accessed = (
        x.size * x.dtype.itemsize
        + sum(a.size * a.dtype.itemsize for a in (w1_in, b1, w2_in, b2, w3, b3))
        + out_rows * _CHUNK * 4)

    out = pl.pallas_call(
        mlp_kernel,
        out_shape=jax.ShapeDtypeStruct((out_rows, _CHUNK), jnp.float32),
        grid=grid,
        in_specs=in_specs,
        out_specs=out_specs,
        compiler_params=pltpu.CompilerParams(
            dimension_semantics=("parallel",),
            vmem_limit_bytes=48 * 1024 * 1024,
        ),
        cost_estimate=pl.CostEstimate(
            flops=flops, transcendentals=0, bytes_accessed=bytes_accessed),
    )(x, w1_in, b1, w2_in, b2, w3, b3)

    # Undo the lane-dense packing (flatten + drop padded tail), then apply
    # torch.squeeze semantics (N==1 collapses to a scalar).
    return jnp.squeeze(out.reshape(-1)[:N])


def orthogonal_init(key, rows, cols):
    """Deterministic semi-orthogonal matrix of shape (rows, cols),
    mimicking nn.init.orthogonal_ (gain=1)."""
    a = jax.random.normal(key, (max(rows, cols), min(rows, cols)), dtype=jnp.float32)
    q, r = jnp.linalg.qr(a)
    q = q * jnp.sign(jnp.diagonal(r))[None, :]
    if rows < cols:
        q = q.T
    return q[:rows, :cols]


def init_params(key, in_shape, hidden_size):
    """Build weights the same way the PyTorch module does (orthogonal W, zero b).
    Weights are stored transposed, i.e. (in_features, out_features)."""
    k1, k2, k3 = jax.random.split(key, 3)

    w1 = orthogonal_init(k1, hidden_size, in_shape).T            # (p, H)
    b1 = jnp.zeros((1, hidden_size), dtype=jnp.float32)          # (1, H)

    w2 = orthogonal_init(k2, hidden_size, hidden_size).T         # (H, H)
    b2 = jnp.zeros((1, hidden_size), dtype=jnp.float32)          # (1, H)

    w3 = orthogonal_init(k3, 1, hidden_size).T                   # (H, 1)
    b3 = jnp.zeros((1, 1), dtype=jnp.float32)                    # (1, 1)

    return (w1, b1, w2, b2, w3, b3)


def reference_forward(x, params):
    """Plain-JAX reference of the same forward pass (eval mode, f32)."""
    w1, b1, w2, b2, w3, b3 = params
    h1 = jnp.maximum(x @ w1 + b1, 0.0)
    h2 = jnp.maximum(h1 @ w2 + b2, 0.0)
    return jnp.squeeze(h2 @ w3 + b3)


if __name__ == "__main__":
    # Small shapes consistent with the module: batch=8, in_shape(p)=16, hidden=64
    N, P, H = 8, 16, 64

    key = jax.random.PRNGKey(0)
    kx, kp = jax.random.split(key)

    x = jax.random.normal(kx, (N, P), dtype=jnp.float32)
    params = init_params(kp, in_shape=P, hidden_size=H)

    y_ref = reference_forward(x, params)
    y = jax.block_until_ready(mse_model_forward(x, params))
    assert y.shape == (N,), f"unexpected output shape {y.shape}"
    assert jnp.allclose(y, y_ref, atol=1e-4, rtol=1e-4), "f32 mismatch (small batch)"

    # Mid-size ragged batch: exercises the >=2-step grid (v7x dual-TC sharding),
    # batch padding in the last tile, and the lane-dense output repacking.
    N2 = 2500
    x2 = jax.random.normal(jax.random.PRNGKey(1), (N2, P), dtype=jnp.float32)
    y2_ref = reference_forward(x2, params)
    y2 = jax.block_until_ready(mse_model_forward(x2, params))
    assert y2.shape == (N2,), f"unexpected output shape {y2.shape}"
    assert jnp.allclose(y2, y2_ref, atol=1e-4, rtol=1e-4), "f32 mismatch (large batch)"

    # bf16 MXU-feed path: x stays f32 in HBM (cast in-kernel), f32 accumulation.
    # Looser tolerance: x/W1/W2 and the h1 activations are rounded to bf16.
    y2_bf16 = jax.block_until_ready(
        mse_model_forward(x2, params, compute_dtype=jnp.bfloat16))
    assert y2_bf16.shape == (N2,), f"unexpected bf16 output shape {y2_bf16.shape}"
    assert jnp.allclose(y2_bf16, y2_ref, atol=1e-1, rtol=1e-1), "bf16 mismatch"

    print("KERNEL_OK")
</pallas_src>

<mosaic_0001>
module attributes {stable_mosaic.version = 11 : i64} {
  func.func @mlp_kernel(%arg0: i32, %arg1: memref<1024x16xf32, #tpu.memory_space<vmem>>, %arg2: memref<16x64xf32, #tpu.memory_space<vmem>>, %arg3: memref<1x64xf32, #tpu.memory_space<vmem>>, %arg4: memref<64x64xf32, #tpu.memory_space<vmem>>, %arg5: memref<1x64xf32, #tpu.memory_space<vmem>>, %arg6: memref<64x1xf32, #tpu.memory_space<vmem>>, %arg7: memref<1x1xf32, #tpu.memory_space<vmem>>, %arg8: memref<8x128xf32, #tpu.memory_space<vmem>>) attributes {dimension_semantics = [#tpu.dimension_semantics<parallel>], iteration_bounds = array<i64: 1>, scalar_prefetch = 0 : i64, scratch_operands = 0 : i64, tpu.core_type = #tpu.core_type<tc>, window_params = [{transform_indices = @transform_0, window_bounds = array<i64: 1024, 16>}, {pipeline_mode = #tpu.pipeline_mode<synchronous>, transform_indices = @transform_1, window_bounds = array<i64: 16, 64>}, {pipeline_mode = #tpu.pipeline_mode<synchronous>, transform_indices = @transform_2, window_bounds = array<i64: 1, 64>}, {pipeline_mode = #tpu.pipeline_mode<synchronous>, transform_indices = @transform_3, window_bounds = array<i64: 64, 64>}, {pipeline_mode = #tpu.pipeline_mode<synchronous>, transform_indices = @transform_4, window_bounds = array<i64: 1, 64>}, {pipeline_mode = #tpu.pipeline_mode<synchronous>, transform_indices = @transform_5, window_bounds = array<i64: 64, 1>}, {pipeline_mode = #tpu.pipeline_mode<synchronous>, transform_indices = @transform_6, window_bounds = array<i64: 1, 1>}, {transform_indices = @transform_7, window_bounds = array<i64: 8, 128>}]} {
    %c0 = arith.constant 0 : index
    %c0_0 = arith.constant 0 : index
    %0 = vector.load %arg2[%c0, %c0_0] : memref<16x64xf32, #tpu.memory_space<vmem>>, vector<16x64xf32>
    %c0_1 = arith.constant 0 : index
    %c0_2 = arith.constant 0 : index
    %1 = vector.load %arg4[%c0_1, %c0_2] : memref<64x64xf32, #tpu.memory_space<vmem>>, vector<64x64xf32>
    %c0_3 = arith.constant 0 : index
    %c0_4 = arith.constant 0 : index
    %2 = vector.load %arg6[%c0_3, %c0_4] : memref<64x1xf32, #tpu.memory_space<vmem>>, vector<64x1xf32>
    %c0_5 = arith.constant 0 : index
    %c0_6 = arith.constant 0 : index
    %3 = vector.load %arg3[%c0_5, %c0_6] : memref<1x64xf32, #tpu.memory_space<vmem>>, vector<1x64xf32>
    %c0_7 = arith.constant 0 : index
    %c0_8 = arith.constant 0 : index
    %4 = vector.load %arg5[%c0_7, %c0_8] : memref<1x64xf32, #tpu.memory_space<vmem>>, vector<1x64xf32>
    %c0_9 = arith.constant 0 : index
    %c0_10 = arith.constant 0 : index
    %5 = vector.load %arg7[%c0_9, %c0_10] : memref<1x1xf32, #tpu.memory_space<vmem>>, vector<1x1xf32>
    %c0_i32 = arith.constant 0 : i32
    %c8_i32 = arith.constant 8 : i32
    %6 = arith.addi %c0_i32, %c8_i32 : i32
    %c1_i32 = arith.constant 1 : i32
    scf.for %arg9 = %c0_i32 to %6 step %c1_i32  : i32 {
      %c128_i32 = arith.constant 128 : i32
      %7 = arith.muli %arg9, %c128_i32 : i32
      %8 = tpu.assume_multiple %7, 128 : i32
      %9 = arith.index_cast %8 : i32 to index
      %c0_12 = arith.constant 0 : index
      %10 = vector.load %arg1[%9, %c0_12] : memref<1024x16xf32, #tpu.memory_space<vmem>>, vector<128x16xf32>
      %cst = arith.constant dense<0.000000e+00> : vector<128x64xf32>
      %11 = tpu.matmul %10, %0, %cst {dimension_numbers = #tpu.dot_dimension_numbers<[1], [0], [0], [1], [0, 0, 1, 1], [], []>} : vector<128x16xf32>, vector<16x64xf32>, vector<128x64xf32> -> vector<128x64xf32>
      %12 = vector.broadcast %3 : vector<1x64xf32> to vector<128x64xf32>
      %13 = arith.addf %11, %12 : vector<128x64xf32>
      %cst_13 = arith.constant 0.000000e+00 : f32
      %14 = vector.broadcast %cst_13 : f32 to vector<128x64xf32>
      %15 = arith.maximumf %13, %14 : vector<128x64xf32>
      %cst_14 = arith.constant dense<0.000000e+00> : vector<128x64xf32>
      %16 = tpu.matmul %15, %1, %cst_14 {dimension_numbers = #tpu.dot_dimension_numbers<[1], [0], [0], [1], [0, 0, 1, 1], [], []>} : vector<128x64xf32>, vector<64x64xf32>, vector<128x64xf32> -> vector<128x64xf32>
      %17 = vector.broadcast %4 : vector<1x64xf32> to vector<128x64xf32>
      %18 = arith.addf %16, %17 : vector<128x64xf32>
      %cst_15 = arith.constant 0.000000e+00 : f32
      %19 = vector.broadcast %cst_15 : f32 to vector<128x64xf32>
      %20 = arith.maximumf %18, %19 : vector<128x64xf32>
      %cst_16 = arith.constant dense<0.000000e+00> : vector<128x1xf32>
      %21 = tpu.matmul %20, %2, %cst_16 {dimension_numbers = #tpu.dot_dimension_numbers<[1], [0], [0], [1], [0, 0, 1, 1], [], []>} : vector<128x64xf32>, vector<64x1xf32>, vector<128x1xf32> -> vector<128x1xf32>
      %22 = vector.broadcast %5 : vector<1x1xf32> to vector<128x1xf32>
      %23 = arith.addf %21, %22 : vector<128x1xf32>
      %24 = tpu.transpose %23, [1, 0] : vector<128x1xf32> -> vector<1x128xf32>
      %25 = arith.index_cast %arg9 : i32 to index
      %c0_17 = arith.constant 0 : index
      %26 = vector.load %arg8[%25, %c0_17] : memref<8x128xf32, #tpu.memory_space<vmem>>, vector<1x128xf32>
      tpu.vector_store %arg8[%25, %c0_17], %24 {strides = array<i32>} : memref<8x128xf32, #tpu.memory_space<vmem>>, vector<1x128xf32>,
    }
    %c8_i32_11 = arith.constant 8 : i32
    return
  }
  func.func @transform_0(%arg0: i32) -> (i32, i32) {
    %c0_i32 = arith.constant 0 : i32
    %c0_i32_0 = arith.constant 0 : i32
    return %arg0, %c0_i32 : i32, i32
  }
  func.func @transform_1(%arg0: i32) -> (i32, i32) {
    %c0_i32 = arith.constant 0 : i32
    %c0_i32_0 = arith.constant 0 : i32
    %c0_i32_1 = arith.constant 0 : i32
    return %c0_i32, %c0_i32_0 : i32, i32
  }
  func.func @transform_2(%arg0: i32) -> (i32, i32) {
    %c0_i32 = arith.constant 0 : i32
    %c0_i32_0 = arith.constant 0 : i32
    %c0_i32_1 = arith.constant 0 : i32
    return %c0_i32, %c0_i32_0 : i32, i32
  }
  func.func @transform_3(%arg0: i32) -> (i32, i32) {
    %c0_i32 = arith.constant 0 : i32
    %c0_i32_0 = arith.constant 0 : i32
    %c0_i32_1 = arith.constant 0 : i32
    return %c0_i32, %c0_i32_0 : i32, i32
  }
  func.func @transform_4(%arg0: i32) -> (i32, i32) {
    %c0_i32 = arith.constant 0 : i32
    %c0_i32_0 = arith.constant 0 : i32
    %c0_i32_1 = arith.constant 0 : i32
    return %c0_i32, %c0_i32_0 : i32, i32
  }
  func.func @transform_5(%arg0: i32) -> (i32, i32) {
    %c0_i32 = arith.constant 0 : i32
    %c0_i32_0 = arith.constant 0 : i32
    %c0_i32_1 = arith.constant 0 : i32
    return %c0_i32, %c0_i32_0 : i32, i32
  }
  func.func @transform_6(%arg0: i32) -> (i32, i32) {
    %c0_i32 = arith.constant 0 : i32
    %c0_i32_0 = arith.constant 0 : i32
    %c0_i32_1 = arith.constant 0 : i32
    return %c0_i32, %c0_i32_0 : i32, i32
  }
  func.func @transform_7(%arg0: i32) -> (i32, i32) {
    %c0_i32 = arith.constant 0 : i32
    %c0_i32_0 = arith.constant 0 : i32
    return %arg0, %c0_i32 : i32, i32
  }
}

</mosaic_0001>

<llo_original>
// kernel: tpu_custom_call.1
$region0: #{tpu_custom_call.1}
  #allocation0 [shape = 'u32[]', space=smem, size = 0x4, offset = 0x4, fixed_abs, tag = 'smem constant byte address 0x4 - core index']
  #allocation1 [shape = 'u32[144,128]{1,0:T(1,128)}', space=vmem, size = 0x12000, scoped, tag = 'internal scratch']
  #allocation2 [shape = 'f32[1,1]{1,0:T(1,128)S(1)}', space=vmem, size = 0x200, scoped, tag = 'scoped memory for tpu_custom_call.1']
  %s0 = inlined_call_operand.hbm [shape: f32[8,16], index: 0, kind: input, shape index: {}]
  %s1 = inlined_call_operand.vmem [shape: f32[16,64], index: 1, kind: input, shape index: {}]
  %s2 = inlined_call_operand.hbm [shape: f32[1,64], index: 2, kind: input, shape index: {}]
  %s3 = inlined_call_operand.vmem [shape: f32[64,64], index: 3, kind: input, shape index: {}]
  %s4 = inlined_call_operand.vmem [shape: f32[1,64], index: 4, kind: input, shape index: {}]
  %s5 = inlined_call_operand.vmem [shape: f32[64,1], index: 5, kind: input, shape index: {}]
  %s6 = inlined_call_operand.<no memory space> [shape: f32[1,1], index: 6, kind: input, shape index: {}]
  %s7 = inlined_call_operand.hbm [shape: f32[8,128], index: 7, kind: output, shape index: {}]
  %s8 = sld [smem:[#allocation0]]
  $region53: #{tpu_custom_call.1} parent=0
    _
  %s10 = ssub.s32 1, %s8
  %s11 = scalar_select 0, %s10, %s8
  %v12 = vstv %s6
  %13 = vst [vmem:[#allocation2] sm:$0x1] %v12
  $region1: #{tpu_custom_call.1} parent=0
    #allocation3 [shape = 'u8[524288]{0}', space=vmem, size = 0x80000, scoped, tag = 'input window, operand 0, single buffered']
    #allocation4 [shape = 's32[1]{0}', space=sflag, size = 0x4, scoped, tag = 'scoped memory for tpu_custom_call.1']
    #allocation5 [shape = 's32[1]{0}', space=sflag, size = 0x4, scoped, tag = 'scoped memory for tpu_custom_call.1']
    #allocation6 [shape = 'u8[512]{0}', space=vmem, size = 0x400, scoped, tag = 'input window, operand 2, single buffered']
    #allocation7 [shape = 's32[1]{0}', space=sflag, size = 0x4, scoped, tag = 'scoped memory for tpu_custom_call.1']
    #allocation8 [shape = 'u8[4096]{0}', space=vmem, size = 0x1000, scoped, tag = 'output window, operand 0, single buffered']
    %14 = vsyncpa [#allocation4], 0
    %15 = vsyncpa [#allocation7], 0
    %16 = vsyncpa [#allocation5], 0
    // Predicated region
    $region2: #{tpu_custom_call.1} parent=1 // pred_check
      _
    $region3: #{tpu_custom_call.1} parent=1 // pred_check_branch
      %18 = sbr.rel (0) target = $region5
    $region4: #{tpu_custom_call.1} parent=1 // pred_region
      %s20 = ssub.s32 16384, 128
      %21 = vsyncadd [#allocation4], %s20
      %s22 = sshll.u32 [#allocation3], 4
      %s23 = int_to_ptr.vmem [resolvable:$true] %s22
      %28 = dma.hbm_to_vmem [thread:$0]  %s0, 128, %s23, [#allocation4], 128, 128, 8
    $region5: #{tpu_custom_call.1} parent=1 // pred_fallthru
      _
    // Predicated region
    $region6: #{tpu_custom_call.1} parent=1 // pred_check
      _
    $region7: #{tpu_custom_call.1} parent=1 // pred_check_branch
      %30 = sbr.rel (0) target = $region9
    $region8: #{tpu_custom_call.1} parent=1 // pred_region
      _
    $region9: #{tpu_custom_call.1} parent=1 // pred_fallthru
      _
    // Predicated region
    $region10: #{tpu_custom_call.1} parent=1 // pred_check
      _
    $region11: #{tpu_custom_call.1} parent=1 // pred_check_branch
      %32 = sbr.rel (0) target = $region13
    $region12: #{tpu_custom_call.1} parent=1 // pred_region
      %s34 = ssub.s32 16, 16
      %35 = vsyncadd [#allocation7], %s34
      %s37 = sshll.u32 [#allocation6], 4
      %s38 = int_to_ptr.vmem [resolvable:$true] %s37
      %40 = dma.hbm_to_vmem [thread:$0]  %s2, 16, %s38, [#allocation7]
    $region13: #{tpu_custom_call.1} parent=1 // pred_fallthru
      _
    // Predicated region
    $region14: #{tpu_custom_call.1} parent=1 // pred_check
      _
    $region15: #{tpu_custom_call.1} parent=1 // pred_check_branch
      %42 = sbr.rel (0) target = $region17
    $region16: #{tpu_custom_call.1} parent=1 // pred_region
      _
    $region17: #{tpu_custom_call.1} parent=1 // pred_fallthru
      _
    // Predicated region
    $region18: #{tpu_custom_call.1} parent=1 // pred_check
      _
    $region19: #{tpu_custom_call.1} parent=1 // pred_check_branch
      %44 = sbr.rel (0) target = $region21
    $region20: #{tpu_custom_call.1} parent=1 // pred_region
      _
    $region21: #{tpu_custom_call.1} parent=1 // pred_fallthru
      _
    // Predicated region
    $region22: #{tpu_custom_call.1} parent=1 // pred_check
      _
    $region23: #{tpu_custom_call.1} parent=1 // pred_check_branch
      %46 = sbr.rel (0) target = $region25
    $region24: #{tpu_custom_call.1} parent=1 // pred_region
      _
    $region25: #{tpu_custom_call.1} parent=1 // pred_fallthru
      _
    // Predicated region
    $region26: #{tpu_custom_call.1} parent=1 // pred_check
      _
    $region27: #{tpu_custom_call.1} parent=1 // pred_check_branch
      %48 = sbr.rel (0) target = $region29
    $region28: #{tpu_custom_call.1} parent=1 // pred_region
      _
    $region29: #{tpu_custom_call.1} parent=1 // pred_fallthru
      _
    // Predicated region
    $region30: #{tpu_custom_call.1} parent=1 // pred_check
      _
    $region31: #{tpu_custom_call.1} parent=1 // pred_check_branch
      %50 = sbr.rel (0) target = $region33
    $region32: #{tpu_custom_call.1} parent=1 // pred_region
      %51 = dma.done [#allocation4], 16384
    $region33: #{tpu_custom_call.1} parent=1 // pred_fallthru
      _
    // Predicated region
    $region34: #{tpu_custom_call.1} parent=1 // pred_check
      _
    $region35: #{tpu_custom_call.1} parent=1 // pred_check_branch
      %53 = sbr.rel (0) target = $region37
    $region36: #{tpu_custom_call.1} parent=1 // pred_region
      %54 = dma.done [#allocation7], 16
    $region37: #{tpu_custom_call.1} parent=1 // pred_fallthru
      _
    %v55 = vld [vmem:[%s1] sm:$0xff]
    %v56 = vld [vmem:[%s1 + $0x8] sm:$0xff]
    %v57 = vld [vmem:[%s3] sm:$0xff]
    %v58 = vld [vmem:[%s3 + $0x8] sm:$0xff]
    %v59 = vld [vmem:[%s3 + $0x10] sm:$0xff]
    %v60 = vld [vmem:[%s3 + $0x18] sm:$0xff]
    %v61 = vld [vmem:[%s3 + $0x20] sm:$0xff]
    %v62 = vld [vmem:[%s3 + $0x28] sm:$0xff]
    %v63 = vld [vmem:[%s3 + $0x30] sm:$0xff]
    %v64 = vld [vmem:[%s3 + $0x38] sm:$0xff]
    %v65 = vld [vmem:[%s5] sm:$0xff]
    %v66 = vld [vmem:[%s5 + $0x8] sm:$0xff]
    %v67 = vld [vmem:[%s5 + $0x10] sm:$0xff]
    %v68 = vld [vmem:[%s5 + $0x18] sm:$0xff]
    %v69 = vld [vmem:[%s5 + $0x20] sm:$0xff]
    %v70 = vld [vmem:[%s5 + $0x28] sm:$0xff]
    %v71 = vld [vmem:[%s5 + $0x30] sm:$0xff]
    %v72 = vld [vmem:[%s5 + $0x38] sm:$0xff]
    %v73 = vld [vmem:[#allocation6] sm:$0x1]
    %v74 = vld [vmem:[%s4] sm:$0x1]
    %v75 = vld [vmem:[#allocation2] sm:$0x1]
    loop: start=0, step=1, limit=8
    $region38: #{tpu_custom_call.1} parent=1 // loop_pre_header
      _
    $region39: #{tpu_custom_call.1} parent=1 // loop_header
      %s77 = sphi 0, %s81
      %p78 = scmp.ge.s32.totalorder %s77, 8
    $region40: #{tpu_custom_call.1} parent=1 // loop_header_branch
      %80 = sbr.rel (%p78) target = $region44
    $region41: #{tpu_custom_call.1} parent=1 // loop_body
      %s82 = smul.u32 %s77, 128
      %s83 = scalar_lea.vmem [#allocation3], %s82
      %v84 = vld [vmem:[%s83] sm:$0xff]
      %v85 = vld [vmem:[%s83 + $0x8] sm:$0xff]
      %v86 = vld [vmem:[%s83 + $0x10] sm:$0xff]
      %v87 = vld [vmem:[%s83 + $0x18] sm:$0xff]
      %v88 = vld [vmem:[%s83 + $0x20] sm:$0xff]
      %v89 = vld [vmem:[%s83 + $0x28] sm:$0xff]
      %v90 = vld [vmem:[%s83 + $0x30] sm:$0xff]
      %v91 = vld [vmem:[%s83 + $0x38] sm:$0xff]
      %v92 = vld [vmem:[%s83 + $0x40] sm:$0xff]
      %v93 = vld [vmem:[%s83 + $0x48] sm:$0xff]
      %v94 = vld [vmem:[%s83 + $0x50] sm:$0xff]
      %v95 = vld [vmem:[%s83 + $0x58] sm:$0xff]
      %v96 = vld [vmem:[%s83 + $0x60] sm:$0xff]
      %v97 = vld [vmem:[%s83 + $0x68] sm:$0xff]
      %v98 = vld [vmem:[%s83 + $0x70] sm:$0xff]
      %v99 = vld [vmem:[%s83 + $0x78] sm:$0xff]
      %v101 = vlaneseq
      %v102 = vshrl.u32 %v101, 7
      %v103 = vsub.s32 0, %v102
      %v104 = vrot.slane %v73, %v103
      %vm106 = vcmask 130048
      %v108 = vsel %vm106, %v84, 0
      %v111 = vsel %vm106, %v85, 0
      %v114 = vsel %vm106, %v86, 0
      %v117 = vsel %vm106, %v87, 0
      %v120 = vsel %vm106, %v88, 0
      %v123 = vsel %vm106, %v89, 0
      %v126 = vsel %vm106, %v90, 0
      %v129 = vsel %vm106, %v91, 0
      %v132 = vsel %vm106, %v92, 0
      %v135 = vsel %vm106, %v93, 0
      %v138 = vsel %vm106, %v94, 0
      %v141 = vsel %vm106, %v95, 0
      %v144 = vsel %vm106, %v96, 0
      %v147 = vsel %vm106, %v97, 0
      %v150 = vsel %vm106, %v98, 0
      %v153 = vsel %vm106, %v99, 0
      %155 = vmatprep.subr.mxu0 0.0
      %156 = vmatpush1.msra.mxu0 %v55
      %157 = vmatprep.subr.mxu0 0.0
      %158 = vmatpush1.msra.mxu0 %v56
      %159 = vmatprep.subr.mxu0 0.0
      %160 = vmatpush1.msra.mxu0 0.0
      %161 = vmatprep.subr.mxu0 0.0
      %162 = vmatpush1.msra.mxu0 0.0
      %163 = vmatprep.subr.mxu0 0.0
      %164 = vmatpush1.msra.mxu0 0.0
      %165 = vmatprep.subr.mxu0 0.0
      %166 = vmatpush1.msra.mxu0 0.0
      %167 = vmatprep.subr.mxu0 0.0
      %168 = vmatpush1.msra.mxu0 0.0
      %169 = vmatprep.subr.mxu0 0.0
      %170 = vmatpush1.msra.mxu0 0.0
      %171 = vmatprep.subr.mxu0 0.0
      %172 = vmatpush1.msra.mxu0 0.0
      %173 = vmatprep.subr.mxu0 0.0
      %174 = vmatpush1.msra.mxu0 0.0
      %175 = vmatprep.subr.mxu0 0.0
      %176 = vmatpush1.msra.mxu0 0.0
      %177 = vmatprep.subr.mxu0 0.0
      %178 = vmatpush1.msra.mxu0 0.0
      %179 = vmatprep.subr.mxu0 0.0
      %180 = vmatpush1.msra.mxu0 0.0
      %181 = vmatprep.subr.mxu0 0.0
      %182 = vmatpush1.msra.mxu0 0.0
      %183 = vmatprep.subr.mxu0 0.0
      %184 = vmatpush1.msra.mxu0 0.0
      %185 = vmatprep.subr.mxu0 0.0
      %186 = vmatpush1.msra.mxu0 0.0
      %187 = vmatprep.subr.mxu0 0.0
      %188 = vmatpush1.msra.mxu0 0.0
      %189 = vmatprep.subr.mxu0 0.0
      %190 = vmatpush1.msra.mxu0 0.0
      %191 = vmatprep.subr.mxu0 0.0
      %192 = vmatpush1.msra.mxu0 0.0
      %193 = vmatprep.subr.mxu0 0.0
      %194 = vmatpush1.msra.mxu0 0.0
      %195 = vmatprep.subr.mxu0 0.0
      %196 = vmatpush1.msra.mxu0 0.0
      %197 = vmatprep.subr.mxu0 0.0
      %198 = vmatpush1.msra.mxu0 0.0
      %199 = vmatprep.subr.mxu0 0.0
      %200 = vmatpush1.msra.mxu0 0.0
      %201 = vmatprep.subr.mxu0 0.0
      %202 = vmatpush1.msra.mxu0 0.0
      %203 = vmatprep.subr.mxu0 0.0
      %204 = vmatpush1.msra.mxu0 0.0
      %205 = vmatprep.subr.mxu0 0.0
      %206 = vmatpush1.msra.mxu0 0.0
      %207 = vmatprep.subr.mxu0 0.0
      %208 = vmatpush1.msra.mxu0 0.0
      %209 = vmatprep.subr.mxu0 0.0
      %210 = vmatpush1.msra.mxu0 0.0
      %211 = vmatprep.subr.mxu0 0.0
      %212 = vmatpush1.msra.mxu0 0.0
      %213 = vmatprep.subr.mxu0 0.0
      %214 = vmatpush1.msra.mxu0 0.0
      %215 = vmatprep.subr.mxu0 0.0
      %216 = vmatpush1.msra.mxu0 0.0
      %217 = vmatprep.subr.mxu0 0.0
      %218 = vmatpush1.msra.mxu0 0.0
      %219 = vmatprep.mubr.f32.mxu0 0.0
      %220 = vmatmul.mubr.f32.gmra.mrb[0].mxu0 %v108
      %v221 = vpop.f32.mrb[0].mxu0
      %v222 = vadd.f32 %v104, %v221
      %v223 = vpop.f32.mrb[0].mxu0
      %224 = vmatprep.mubr.f32.mxu0 0.0
      %225 = vmatmul.mubr.f32.gmra.mrb[0].mxu0 %v111
      %v226 = vpop.f32.mrb[0].mxu0
      %v227 = vadd.f32 %v104, %v226
      %v228 = vpop.f32.mrb[0].mxu0
      %229 = vmatprep.mubr.f32.mxu0 0.0
      %230 = vmatmul.mubr.f32.gmra.mrb[0].mxu0 %v114
      %v231 = vpop.f32.mrb[0].mxu0
      %v232 = vadd.f32 %v104, %v231
      %v233 = vpop.f32.mrb[0].mxu0
      %234 = vmatprep.mubr.f32.mxu0 0.0
      %235 = vmatmul.mubr.f32.gmra.mrb[0].mxu0 %v117
      %v236 = vpop.f32.mrb[0].mxu0
      %v237 = vadd.f32 %v104, %v236
      %v238 = vpop.f32.mrb[0].mxu0
      %239 = vmatprep.mubr.f32.mxu0 0.0
      %240 = vmatmul.mubr.f32.gmra.mrb[0].mxu0 %v120
      %v241 = vpop.f32.mrb[0].mxu0
      %v242 = vadd.f32 %v104, %v241
      %v243 = vpop.f32.mrb[0].mxu0
      %244 = vmatprep.mubr.f32.mxu0 0.0
      %245 = vmatmul.mubr.f32.gmra.mrb[0].mxu0 %v123
      %v246 = vpop.f32.mrb[0].mxu0
      %v247 = vadd.f32 %v104, %v246
      %v248 = vpop.f32.mrb[0].mxu0
      %249 = vmatprep.mubr.f32.mxu0 0.0
      %250 = vmatmul.mubr.f32.gmra.mrb[0].mxu0 %v126
      %v251 = vpop.f32.mrb[0].mxu0
      %v252 = vadd.f32 %v104, %v251
      %v253 = vpop.f32.mrb[0].mxu0
      %254 = vmatprep.mubr.f32.mxu0 0.0
      %255 = vmatmul.mubr.f32.gmra.mrb[0].mxu0 %v129
      %v256 = vpop.f32.mrb[0].mxu0
      %v257 = vadd.f32 %v104, %v256
      %v258 = vpop.f32.mrb[0].mxu0
      %259 = vmatprep.mubr.f32.mxu0 0.0
      %260 = vmatmul.mubr.f32.gmra.mrb[0].mxu0 %v132
      %v261 = vpop.f32.mrb[0].mxu0
      %v262 = vadd.f32 %v104, %v261
      %v263 = vpop.f32.mrb[0].mxu0
      %264 = vmatprep.mubr.f32.mxu0 0.0
      %265 = vmatmul.mubr.f32.gmra.mrb[0].mxu0 %v135
      %v266 = vpop.f32.mrb[0].mxu0
      %v267 = vadd.f32 %v104, %v266
      %v268 = vpop.f32.mrb[0].mxu0
      %269 = vmatprep.mubr.f32.mxu0 0.0
      %270 = vmatmul.mubr.f32.gmra.mrb[0].mxu0 %v138
      %v271 = vpop.f32.mrb[0].mxu0
      %v272 = vadd.f32 %v104, %v271
      %v273 = vpop.f32.mrb[0].mxu0
      %274 = vmatprep.mubr.f32.mxu0 0.0
      %275 = vmatmul.mubr.f32.gmra.mrb[0].mxu0 %v141
      %v276 = vpop.f32.mrb[0].mxu0
      %v277 = vadd.f32 %v104, %v276
      %v278 = vpop.f32.mrb[0].mxu0
      %279 = vmatprep.mubr.f32.mxu0 0.0
      %280 = vmatmul.mubr.f32.gmra.mrb[0].mxu0 %v144
      %v281 = vpop.f32.mrb[0].mxu0
      %v282 = vadd.f32 %v104, %v281
      %v283 = vpop.f32.mrb[0].mxu0
      %284 = vmatprep.mubr.f32.mxu0 0.0
      %285 = vmatmul.mubr.f32.gmra.mrb[0].mxu0 %v147
      %v286 = vpop.f32.mrb[0].mxu0
      %v287 = vadd.f32 %v104, %v286
      %v288 = vpop.f32.mrb[0].mxu0
      %289 = vmatprep.mubr.f32.mxu0 0.0
      %290 = vmatmul.mubr.f32.gmra.mrb[0].mxu0 %v150
      %v291 = vpop.f32.mrb[0].mxu0
      %v292 = vadd.f32 %v104, %v291
      %v293 = vpop.f32.mrb[0].mxu0
      %294 = vmatprep.mubr.f32.mxu0 0.0
      %295 = vmatmul.mubr.f32.gmra.mrb[0].mxu0 %v153
      %v296 = vpop.f32.mrb[0].mxu0
      %v297 = vadd.f32 %v104, %v296
      %v298 = vpop.f32.mrb[0].mxu0
      %299 = vdwg.mxu0
      %v300 = vmax.f32 %v222, 0.0
      %v301 = vmax.f32 %v227, 0.0
      %v302 = vmax.f32 %v232, 0.0
      %v303 = vmax.f32 %v237, 0.0
      %v304 = vmax.f32 %v242, 0.0
      %v305 = vmax.f32 %v247, 0.0
      %v306 = vmax.f32 %v252, 0.0
      %v307 = vmax.f32 %v257, 0.0
      %v308 = vmax.f32 %v262, 0.0
      %v309 = vmax.f32 %v267, 0.0
      %v310 = vmax.f32 %v272, 0.0
      %v311 = vmax.f32 %v277, 0.0
      %v312 = vmax.f32 %v282, 0.0
      %v313 = vmax.f32 %v287, 0.0
      %v314 = vmax.f32 %v292, 0.0
      %v315 = vmax.f32 %v297, 0.0
      %v317 = vlaneseq
      %v318 = vshrl.u32 %v317, 7
      %v319 = vsub.s32 0, %v318
      %v320 = vrot.slane %v74, %v319
      %vm322 = vcmask 523264
      %v324 = vsel %vm322, %v300, 0
      %v327 = vsel %vm322, %v301, 0
      %v330 = vsel %vm322, %v302, 0
      %v333 = vsel %vm322, %v303, 0
      %v336 = vsel %vm322, %v304, 0
      %v339 = vsel %vm322, %v305, 0
      %v342 = vsel %vm322, %v306, 0
      %v345 = vsel %vm322, %v307, 0
      %v348 = vsel %vm322, %v308, 0
      %v351 = vsel %vm322, %v309, 0
      %v354 = vsel %vm322, %v310, 0
      %v357 = vsel %vm322, %v311, 0
      %v360 = vsel %vm322, %v312, 0
      %v363 = vsel %vm322, %v313, 0
      %v366 = vsel %vm322, %v314, 0
      %v369 = vsel %vm322, %v315, 0
      %371 = vmatprep.subr.mxu0 0.0
      %372 = vmatpush1.msra.mxu0 %v57
      %373 = vmatprep.subr.mxu0 0.0
      %374 = vmatpush1.msra.mxu0 %v58
      %375 = vmatprep.subr.mxu0 0.0
      %376 = vmatpush1.msra.mxu0 %v59
      %377 = vmatprep.subr.mxu0 0.0
      %378 = vmatpush1.msra.mxu0 %v60
      %379 = vmatprep.subr.mxu0 0.0
      %380 = vmatpush1.msra.mxu0 %v61
      %381 = vmatprep.subr.mxu0 0.0
      %382 = vmatpush1.msra.mxu0 %v62
      %383 = vmatprep.subr.mxu0 0.0
      %384 = vmatpush1.msra.mxu0 %v63
      %385 = vmatprep.subr.mxu0 0.0
      %386 = vmatpush1.msra.mxu0 %v64
      %387 = vmatprep.subr.mxu0 0.0
      %388 = vmatpush1.msra.mxu0 0.0
      %389 = vmatprep.subr.mxu0 0.0
      %390 = vmatpush1.msra.mxu0 0.0
      %391 = vmatprep.subr.mxu0 0.0
      %392 = vmatpush1.msra.mxu0 0.0
      %393 = vmatprep.subr.mxu0 0.0
      %394 = vmatpush1.msra.mxu0 0.0
      %395 = vmatprep.subr.mxu0 0.0
      %396 = vmatpush1.msra.mxu0 0.0
      %397 = vmatprep.subr.mxu0 0.0
      %398 = vmatpush1.msra.mxu0 0.0
      %399 = vmatprep.subr.mxu0 0.0
      %400 = vmatpush1.msra.mxu0 0.0
      %401 = vmatprep.subr.mxu0 0.0
      %402 = vmatpush1.msra.mxu0 0.0
      %403 = vmatprep.subr.mxu0 0.0
      %404 = vmatpush1.msra.mxu0 0.0
      %405 = vmatprep.subr.mxu0 0.0
      %406 = vmatpush1.msra.mxu0 0.0
      %407 = vmatprep.subr.mxu0 0.0
      %408 = vmatpush1.msra.mxu0 0.0
      %409 = vmatprep.subr.mxu0 0.0
      %410 = vmatpush1.msra.mxu0 0.0
      %411 = vmatprep.subr.mxu0 0.0
      %412 = vmatpush1.msra.mxu0 0.0
      %413 = vmatprep.subr.mxu0 0.0
      %414 = vmatpush1.msra.mxu0 0.0
      %415 = vmatprep.subr.mxu0 0.0
      %416 = vmatpush1.msra.mxu0 0.0
      %417 = vmatprep.subr.mxu0 0.0
      %418 = vmatpush1.msra.mxu0 0.0
      %419 = vmatprep.subr.mxu0 0.0
      %420 = vmatpush1.msra.mxu0 0.0
      %421 = vmatprep.subr.mxu0 0.0
      %422 = vmatpush1.msra.mxu0 0.0
      %423 = vmatprep.subr.mxu0 0.0
      %424 = vmatpush1.msra.mxu0 0.0
      %425 = vmatprep.subr.mxu0 0.0
      %426 = vmatpush1.msra.mxu0 0.0
      %427 = vmatprep.subr.mxu0 0.0
      %428 = vmatpush1.msra.mxu0 0.0
      %429 = vmatprep.subr.mxu0 0.0
      %430 = vmatpush1.msra.mxu0 0.0
      %431 = vmatprep.subr.mxu0 0.0
      %432 = vmatpush1.msra.mxu0 0.0
      %433 = vmatprep.subr.mxu0 0.0
      %434 = vmatpush1.msra.mxu0 0.0
      %435 = vmatprep.mubr.f32.mxu0 0.0
      %436 = vmatmul.mubr.f32.gmra.mrb[0].mxu0 %v324
      %v437 = vpop.f32.mrb[0].mxu0
      %v438 = vadd.f32 %v320, %v437
      %v439 = vpop.f32.mrb[0].mxu0
      %440 = vmatprep.mubr.f32.mxu0 0.0
      %441 = vmatmul.mubr.f32.gmra.mrb[0].mxu0 %v327
      %v442 = vpop.f32.mrb[0].mxu0
      %v443 = vadd.f32 %v320, %v442
      %v444 = vpop.f32.mrb[0].mxu0
      %445 = vmatprep.mubr.f32.mxu0 0.0
      %446 = vmatmul.mubr.f32.gmra.mrb[0].mxu0 %v330
      %v447 = vpop.f32.mrb[0].mxu0
      %v448 = vadd.f32 %v320, %v447
      %v449 = vpop.f32.mrb[0].mxu0
      %450 = vmatprep.mubr.f32.mxu0 0.0
      %451 = vmatmul.mubr.f32.gmra.mrb[0].mxu0 %v333
      %v452 = vpop.f32.mrb[0].mxu0
      %v453 = vadd.f32 %v320, %v452
      %v454 = vpop.f32.mrb[0].mxu0
      %455 = vmatprep.mubr.f32.mxu0 0.0
      %456 = vmatmul.mubr.f32.gmra.mrb[0].mxu0 %v336
      %v457 = vpop.f32.mrb[0].mxu0
      %v458 = vadd.f32 %v320, %v457
      %v459 = vpop.f32.mrb[0].mxu0
      %460 = vmatprep.mubr.f32.mxu0 0.0
      %461 = vmatmul.mubr.f32.gmra.mrb[0].mxu0 %v339
      %v462 = vpop.f32.mrb[0].mxu0
      %v463 = vadd.f32 %v320, %v462
      %v464 = vpop.f32.mrb[0].mxu0
      %465 = vmatprep.mubr.f32.mxu0 0.0
      %466 = vmatmul.mubr.f32.gmra.mrb[0].mxu0 %v342
      %v467 = vpop.f32.mrb[0].mxu0
      %v468 = vadd.f32 %v320, %v467
      %v469 = vpop.f32.mrb[0].mxu0
      %470 = vmatprep.mubr.f32.mxu0 0.0
      %471 = vmatmul.mubr.f32.gmra.mrb[0].mxu0 %v345
      %v472 = vpop.f32.mrb[0].mxu0
      %v473 = vadd.f32 %v320, %v472
      %v474 = vpop.f32.mrb[0].mxu0
      %475 = vmatprep.mubr.f32.mxu0 0.0
      %476 = vmatmul.mubr.f32.gmra.mrb[0].mxu0 %v348
      %v477 = vpop.f32.mrb[0].mxu0
      %v478 = vadd.f32 %v320, %v477
      %v479 = vpop.f32.mrb[0].mxu0
      %480 = vmatprep.mubr.f32.mxu0 0.0
      %481 = vmatmul.mubr.f32.gmra.mrb[0].mxu0 %v351
      %v482 = vpop.f32.mrb[0].mxu0
      %v483 = vadd.f32 %v320, %v482
      %v484 = vpop.f32.mrb[0].mxu0
      %485 = vmatprep.mubr.f32.mxu0 0.0
      %486 = vmatmul.mubr.f32.gmra.mrb[0].mxu0 %v354
      %v487 = vpop.f32.mrb[0].mxu0
      %v488 = vadd.f32 %v320, %v487
      %v489 = vpop.f32.mrb[0].mxu0
      %490 = vmatprep.mubr.f32.mxu0 0.0
      %491 = vmatmul.mubr.f32.gmra.mrb[0].mxu0 %v357
      %v492 = vpop.f32.mrb[0].mxu0
      %v493 = vadd.f32 %v320, %v492
      %v494 = vpop.f32.mrb[0].mxu0
      %495 = vmatprep.mubr.f32.mxu0 0.0
      %496 = vmatmul.mubr.f32.gmra.mrb[0].mxu0 %v360
      %v497 = vpop.f32.mrb[0].mxu0
      %v498 = vadd.f32 %v320, %v497
      %v499 = vpop.f32.mrb[0].mxu0
      %500 = vmatprep.mubr.f32.mxu0 0.0
      %501 = vmatmul.mubr.f32.gmra.mrb[0].mxu0 %v363
      %v502 = vpop.f32.mrb[0].mxu0
      %v503 = vadd.f32 %v320, %v502
      %v504 = vpop.f32.mrb[0].mxu0
      %505 = vmatprep.mubr.f32.mxu0 0.0
      %506 = vmatmul.mubr.f32.gmra.mrb[0].mxu0 %v366
      %v507 = vpop.f32.mrb[0].mxu0
      %v508 = vadd.f32 %v320, %v507
      %v509 = vpop.f32.mrb[0].mxu0
      %510 = vmatprep.mubr.f32.mxu0 0.0
      %511 = vmatmul.mubr.f32.gmra.mrb[0].mxu0 %v369
      %v512 = vpop.f32.mrb[0].mxu0
      %v513 = vadd.f32 %v320, %v512
      %v514 = vpop.f32.mrb[0].mxu0
      %515 = vdwg.mxu0
      %v516 = vmax.f32 %v438, 0.0
      %v517 = vmax.f32 %v443, 0.0
      %v518 = vmax.f32 %v448, 0.0
      %v519 = vmax.f32 %v453, 0.0
      %v520 = vmax.f32 %v458, 0.0
      %v521 = vmax.f32 %v463, 0.0
      %v522 = vmax.f32 %v468, 0.0
      %v523 = vmax.f32 %v473, 0.0
      %v524 = vmax.f32 %v478, 0.0
      %v525 = vmax.f32 %v483, 0.0
      %v526 = vmax.f32 %v488, 0.0
      %v527 = vmax.f32 %v493, 0.0
      %v528 = vmax.f32 %v498, 0.0
      %v529 = vmax.f32 %v503, 0.0
      %v530 = vmax.f32 %v508, 0.0
      %v531 = vmax.f32 %v513, 0.0
      %v533 = vlaneseq
      %v534 = vshrl.u32 %v533, 7
      %v535 = vsub.s32 0, %v534
      %v536 = vrot.slane %v75, %v535
      %v539 = vsel %vm322, %v516, 0
      %v542 = vsel %vm322, %v517, 0
      %v545 = vsel %vm322, %v518, 0
      %v548 = vsel %vm322, %v519, 0
      %v551 = vsel %vm322, %v520, 0
      %v554 = vsel %vm322, %v521, 0
      %v557 = vsel %vm322, %v522, 0
      %v560 = vsel %vm322, %v523, 0
      %v563 = vsel %vm322, %v524, 0
      %v566 = vsel %vm322, %v525, 0
      %v569 = vsel %vm322, %v526, 0
      %v572 = vsel %vm322, %v527, 0
      %v575 = vsel %vm322, %v528, 0
      %v578 = vsel %vm322, %v529, 0
      %v581 = vsel %vm322, %v530, 0
      %v584 = vsel %vm322, %v531, 0
      %586 = vmatprep.subr.mxu0 0.0
      %587 = vmatpush1.msra.mxu0 %v65
      %588 = vmatprep.subr.mxu0 0.0
      %589 = vmatpush1.msra.mxu0 %v66
      %590 = vmatprep.subr.mxu0 0.0
      %591 = vmatpush1.msra.mxu0 %v67
      %592 = vmatprep.subr.mxu0 0.0
      %593 = vmatpush1.msra.mxu0 %v68
      %594 = vmatprep.subr.mxu0 0.0
      %595 = vmatpush1.msra.mxu0 %v69
      %596 = vmatprep.subr.mxu0 0.0
      %597 = vmatpush1.msra.mxu0 %v70
      %598 = vmatprep.subr.mxu0 0.0
      %599 = vmatpush1.msra.mxu0 %v71
      %600 = vmatprep.subr.mxu0 0.0
      %601 = vmatpush1.msra.mxu0 %v72
      %602 = vmatprep.subr.mxu0 0.0
      %603 = vmatpush1.msra.mxu0 0.0
      %604 = vmatprep.subr.mxu0 0.0
      %605 = vmatpush1.msra.mxu0 0.0
      %606 = vmatprep.subr.mxu0 0.0
      %607 = vmatpush1.msra.mxu0 0.0
      %608 = vmatprep.subr.mxu0 0.0
      %609 = vmatpush1.msra.mxu0 0.0
      %610 = vmatprep.subr.mxu0 0.0
      %611 = vmatpush1.msra.mxu0 0.0
      %612 = vmatprep.subr.mxu0 0.0
      %613 = vmatpush1.msra.mxu0 0.0
      %614 = vmatprep.subr.mxu0 0.0
      %615 = vmatpush1.msra.mxu0 0.0
      %616 = vmatprep.subr.mxu0 0.0
      %617 = vmatpush1.msra.mxu0 0.0
      %618 = vmatprep.subr.mxu0 0.0
      %619 = vmatpush1.msra.mxu0 0.0
      %620 = vmatprep.subr.mxu0 0.0
      %621 = vmatpush1.msra.mxu0 0.0
      %622 = vmatprep.subr.mxu0 0.0
      %623 = vmatpush1.msra.mxu0 0.0
      %624 = vmatprep.subr.mxu0 0.0
      %625 = vmatpush1.msra.mxu0 0.0
      %626 = vmatprep.subr.mxu0 0.0
      %627 = vmatpush1.msra.mxu0 0.0
      %628 = vmatprep.subr.mxu0 0.0
      %629 = vmatpush1.msra.mxu0 0.0
      %630 = vmatprep.subr.mxu0 0.0
      %631 = vmatpush1.msra.mxu0 0.0
      %632 = vmatprep.subr.mxu0 0.0
      %633 = vmatpush1.msra.mxu0 0.0
      %634 = vmatprep.subr.mxu0 0.0
      %635 = vmatpush1.msra.mxu0 0.0
      %636 = vmatprep.subr.mxu0 0.0
      %637 = vmatpush1.msra.mxu0 0.0
      %638 = vmatprep.subr.mxu0 0.0
      %639 = vmatpush1.msra.mxu0 0.0
      %640 = vmatprep.subr.mxu0 0.0
      %641 = vmatpush1.msra.mxu0 0.0
      %642 = vmatprep.subr.mxu0 0.0
      %643 = vmatpush1.msra.mxu0 0.0
      %644 = vmatprep.subr.mxu0 0.0
      %645 = vmatpush1.msra.mxu0 0.0
      %646 = vmatprep.subr.mxu0 0.0
      %647 = vmatpush1.msra.mxu0 0.0
      %648 = vmatprep.subr.mxu0 0.0
      %649 = vmatpush1.msra.mxu0 0.0
      %650 = vmatprep.mubr.f32.mxu0 0.0
      %651 = vmatmul.mubr.f32.gmra.mrb[0].mxu0 %v539
      %v652 = vpop.f32.mrb[0].mxu0
      %v653 = vadd.f32 %v536, %v652
      %v654 = vpop.f32.mrb[0].mxu0
      %655 = vmatprep.mubr.f32.mxu0 0.0
      %656 = vmatmul.mubr.f32.gmra.mrb[0].mxu0 %v542
      %v657 = vpop.f32.mrb[0].mxu0
      %v658 = vadd.f32 %v536, %v657
      %v659 = vpop.f32.mrb[0].mxu0
      %660 = vmatprep.mubr.f32.mxu0 0.0
      %661 = vmatmul.mubr.f32.gmra.mrb[0].mxu0 %v545
      %v662 = vpop.f32.mrb[0].mxu0
      %v663 = vadd.f32 %v536, %v662
      %v664 = vpop.f32.mrb[0].mxu0
      %665 = vmatprep.mubr.f32.mxu0 0.0
      %666 = vmatmul.mubr.f32.gmra.mrb[0].mxu0 %v548
      %v667 = vpop.f32.mrb[0].mxu0
      %v668 = vadd.f32 %v536, %v667
      %v669 = vpop.f32.mrb[0].mxu0
      %670 = vmatprep.mubr.f32.mxu0 0.0
      %671 = vmatmul.mubr.f32.gmra.mrb[0].mxu0 %v551
      %v672 = vpop.f32.mrb[0].mxu0
      %v673 = vadd.f32 %v536, %v672
      %v674 = vpop.f32.mrb[0].mxu0
      %675 = vmatprep.mubr.f32.mxu0 0.0
      %676 = vmatmul.mubr.f32.gmra.mrb[0].mxu0 %v554
      %v677 = vpop.f32.mrb[0].mxu0
      %v678 = vadd.f32 %v536, %v677
      %v679 = vpop.f32.mrb[0].mxu0
      %680 = vmatprep.mubr.f32.mxu0 0.0
      %681 = vmatmul.mubr.f32.gmra.mrb[0].mxu0 %v557
      %v682 = vpop.f32.mrb[0].mxu0
      %v683 = vadd.f32 %v536, %v682
      %v684 = vpop.f32.mrb[0].mxu0
      %685 = vmatprep.mubr.f32.mxu0 0.0
      %686 = vmatmul.mubr.f32.gmra.mrb[0].mxu0 %v560
      %v687 = vpop.f32.mrb[0].mxu0
      %v688 = vadd.f32 %v536, %v687
      %v689 = vpop.f32.mrb[0].mxu0
      %690 = vmatprep.mubr.f32.mxu0 0.0
      %691 = vmatmul.mubr.f32.gmra.mrb[0].mxu0 %v563
      %v692 = vpop.f32.mrb[0].mxu0
      %v693 = vadd.f32 %v536, %v692
      %v694 = vpop.f32.mrb[0].mxu0
      %695 = vmatprep.mubr.f32.mxu0 0.0
      %696 = vmatmul.mubr.f32.gmra.mrb[0].mxu0 %v566
      %v697 = vpop.f32.mrb[0].mxu0
      %v698 = vadd.f32 %v536, %v697
      %v699 = vpop.f32.mrb[0].mxu0
      %700 = vmatprep.mubr.f32.mxu0 0.0
      %701 = vmatmul.mubr.f32.gmra.mrb[0].mxu0 %v569
      %v702 = vpop.f32.mrb[0].mxu0
      %v703 = vadd.f32 %v536, %v702
      %v704 = vpop.f32.mrb[0].mxu0
      %705 = vmatprep.mubr.f32.mxu0 0.0
      %706 = vmatmul.mubr.f32.gmra.mrb[0].mxu0 %v572
      %v707 = vpop.f32.mrb[0].mxu0
      %v708 = vadd.f32 %v536, %v707
      %v709 = vpop.f32.mrb[0].mxu0
      %710 = vmatprep.mubr.f32.mxu0 0.0
      %711 = vmatmul.mubr.f32.gmra.mrb[0].mxu0 %v575
      %v712 = vpop.f32.mrb[0].mxu0
      %v713 = vadd.f32 %v536, %v712
      %v714 = vpop.f32.mrb[0].mxu0
      %715 = vmatprep.mubr.f32.mxu0 0.0
      %716 = vmatmul.mubr.f32.gmra.mrb[0].mxu0 %v578
      %v717 = vpop.f32.mrb[0].mxu0
      %v718 = vadd.f32 %v536, %v717
      %v719 = vpop.f32.mrb[0].mxu0
      %720 = vmatprep.mubr.f32.mxu0 0.0
      %721 = vmatmul.mubr.f32.gmra.mrb[0].mxu0 %v581
      %v722 = vpop.f32.mrb[0].mxu0
      %v723 = vadd.f32 %v536, %v722
      %v724 = vpop.f32.mrb[0].mxu0
      %725 = vmatprep.mubr.f32.mxu0 0.0
      %726 = vmatmul.mubr.f32.gmra.mrb[0].mxu0 %v584
      %v727 = vpop.f32.mrb[0].mxu0
      %v728 = vadd.f32 %v536, %v727
      %v729 = vpop.f32.mrb[0].mxu0
      %730 = vdwg.mxu0
      %731 = vxpose.xlu0.b32.start [1/16] %v653, 128
      %732 = vxpose.xlu0.b32.cont [2/16] %v658, 128
      %733 = vxpose.xlu0.b32.cont [3/16] %v663, 128
      %734 = vxpose.xlu0.b32.cont [4/16] %v668, 128
      %735 = vxpose.xlu0.b32.cont [5/16] %v673, 128
      %736 = vxpose.xlu0.b32.cont [6/16] %v678, 128
      %737 = vxpose.xlu0.b32.cont [7/16] %v683, 128
      %738 = vxpose.xlu0.b32.cont [8/16] %v688, 128
      %739 = vxpose.xlu0.b32.cont [9/16] %v693, 128
      %740 = vxpose.xlu0.b32.cont [10/16] %v698, 128
      %741 = vxpose.xlu0.b32.cont [11/16] %v703, 128
      %742 = vxpose.xlu0.b32.cont [12/16] %v708, 128
      %743 = vxpose.xlu0.b32.cont [13/16] %v713, 128
      %744 = vxpose.xlu0.b32.cont [14/16] %v718, 128
      %745 = vxpose.xlu0.b32.cont [15/16] %v723, 128
      %746 = vxpose.xlu0.b32.end [16/16] %v728, 128
      %v747 = vpop.trf.xlu0
      %v748 = vpop.trf.xlu0
      %v749 = vpop.trf.xlu0
      %v750 = vpop.trf.xlu0
      %v751 = vpop.trf.xlu0
      %v752 = vpop.trf.xlu0
      %v753 = vpop.trf.xlu0
      %v754 = vpop.trf.xlu0
      %v755 = vpop.trf.xlu0
      %v756 = vpop.trf.xlu0
      %v757 = vpop.trf.xlu0
      %v758 = vpop.trf.xlu0
      %v759 = vpop.trf.xlu0
      %v760 = vpop.trf.xlu0
      %v761 = vpop.trf.xlu0
      %v762 = vpop.trf.xlu0
      %s763 = scalar_lea.vmem [#allocation8], %s77
      %764 = vst [vmem:[%s763] sm:$0x1] %v747
    $region42: #{tpu_custom_call.1} parent=1 // loop_footer
      %s81 = sadd.s32 1, %s77
    $region43: #{tpu_custom_call.1} parent=1 // loop_footer_branch
      %76 = sbr.rel target = $region39
    $region44: #{tpu_custom_call.1} parent=1 // loop_exit
      _
    // Predicated region
    $region45: #{tpu_custom_call.1} parent=1 // pred_check
      _
    $region46: #{tpu_custom_call.1} parent=1 // pred_check_branch
      %766 = sbr.rel (0) target = $region48
    $region47: #{tpu_custom_call.1} parent=1 // pred_region
      %s768 = ssub.s32 128, 128
      %769 = vsyncadd [#allocation5], %s768
      %s771 = sshll.u32 [#allocation8], 4
      %s772 = int_to_ptr.vmem [resolvable:$true] %s771
      %774 = dma.vmem_to_hbm [thread:$0]  %s772, 128, %s7, [#allocation5]
    $region48: #{tpu_custom_call.1} parent=1 // pred_fallthru
      _
    // Predicated region
    $region49: #{tpu_custom_call.1} parent=1 // pred_check
      _
    $region50: #{tpu_custom_call.1} parent=1 // pred_check_branch
      %776 = sbr.rel (0) target = $region52
    $region51: #{tpu_custom_call.1} parent=1 // pred_region
      %777 = dma.done [#allocation5], 128
    $region52: #{tpu_custom_call.1} parent=1 // pred_fallthru
      _
    %778 = vsyncpa [#allocation4], 1
    %779 = vsyncpa [#allocation7], 1
    %780 = vsyncpa [#allocation5], 1

</llo_original>
